<compile_context>
chip_gen: v5e
topology: v5e:2x2
jax: 0.10.0
libtpu: 0.0.40
codegen_flags: <defaults>
</compile_context>

<pallas_src>
import jax
import jax.numpy as jnp
from jax import lax
from jax.experimental import pallas as pl
from jax.experimental.pallas import tpu as pltpu


def lstm_fused_kernel(x_ref, wih_ref, bias_ref, whh_ref, wfc_ref, bfc_ref,
                      out_ref, xw_ref):
    """Fused LSTM forward.

    x_ref:    (S, B, I)   time-major input (f32)
    wih_ref:  (I, 4H)     W_ih^T, gates packed contiguously [i|f|g|o]
    bias_ref: (1, 4H)     b_ih + b_hh (packed)
    whh_ref:  (2H, 4H)    W_hh^T with rows [H:2H) zero-padded
    wfc_ref:  (2H, OP)    W_fc^T with rows [H:2H) and cols [O:OP) zero-padded
    bfc_ref:  (1, OP)     b_fc zero-padded to OP lanes
    out_ref:  (B, OP)     lane-dense output (valid in cols [0:O))
    xw_ref:   (S, B, 4H)  VMEM scratch for the hoisted input projection
    """
    S, B, I = x_ref.shape
    W, G = whh_ref.shape          # W = 2H (padded h/c lane width), G = 4H
    H = G // 4

    whh = whh_ref[...]                             # loop-invariant (W, G)
    bias = bias_ref[...].reshape(1, 1, G)

    # ---- Input projection, hoisted off the serial chain -------------------
    if I == 1:
        # Pure VPU broadcast multiply: (S,B,1) * (1,1,4H) + bias.
        xw_ref[...] = x_ref[...] * wih_ref[...].reshape(1, 1, G) + bias
    else:
        xw_ref[...] = (
            jnp.dot(x_ref[...].reshape(S * B, I), wih_ref[...],
                    preferred_element_type=jnp.float32).reshape(S, B, G)
            + bias)

    # ---- Serial recurrence --------------------------------------------------
    h0 = jnp.zeros((B, W), jnp.float32)
    c0 = jnp.zeros((B, W), jnp.float32)

    def step(t, carry):
        h, c = carry
        # 256-column recurrent matmul (one MXU column pass on v6e/v7x).
        # Rows [H:2H) of whh are zero, so junk lanes of h contribute nothing.
        gates = jnp.dot(h, whh, preferred_element_type=jnp.float32) + xw_ref[t]
        g_if = gates[:, :2 * H]          # [ i | f ]   (lane-aligned vreg)
        g_go = gates[:, 2 * H:]          # [ g | o ]   (lane-aligned vreg)

        s_if = jax.nn.sigmoid(g_if)      # [ σi | σf ]        (1 EUP op)
        t_go = jnp.tanh(g_go)            # [ tanh g | junk ]
        s_go = jax.nn.sigmoid(g_go)      # [ junk | σo ]

        # XLU lane rotations swap the two 64-lane halves (free-ish slot).
        f_al = pltpu.roll(s_if, shift=H, axis=1)   # [ σf | σi ]
        o_al = pltpu.roll(s_go, shift=H, axis=1)   # [ σo | junk ]

        # Valid lanes [0:H): c_new = σf*c + σi*tanh(g); lanes [H:2H) = bounded junk.
        c_new = f_al * c + s_if * t_go
        h_new = o_al * jnp.tanh(c_new)             # lanes [0:H): σo*tanh(c_new)
        return (h_new, c_new)

    # Fully unrolled short fixed-trip-count loop (S is small and static).
    h_last, _ = lax.fori_loop(0, S, step, (h0, c0), unroll=True)

    # ---- Final Linear fused into the same kernel ---------------------------
    # wfc rows [H:2H) are zero -> junk lanes of h_last are ignored.
    out_ref[...] = (jnp.dot(h_last, wfc_ref[...],
                            preferred_element_type=jnp.float32)
                    + bfc_ref[...])


def pack_lstm_params(wih, whh, b_ih, b_hh, wfc, bfc, lane=128):
    """One-time packing of PyTorch-shaped LSTM+Linear params (gate order i,f,g,o)."""
    H = whh.shape[1]
    assert (2 * H) % lane == 0, "gate-packed layout requires (2*hidden) % 128 == 0"
    G = 4 * H
    W = 2 * H
    O = wfc.shape[0]
    OP = ((O + lane - 1) // lane) * lane

    wih_p = wih.T.astype(jnp.float32)                                       # (I, 4H)
    bias_p = (b_ih + b_hh).astype(jnp.float32).reshape(1, G)                # (1, 4H)
    whh_p = jnp.pad(whh.T.astype(jnp.float32), ((0, W - H), (0, 0)))        # (2H, 4H)
    wfc_p = jnp.pad(wfc.T.astype(jnp.float32), ((0, W - H), (0, OP - O)))   # (2H, OP)
    bfc_p = jnp.pad(bfc.astype(jnp.float32), (0, OP - O)).reshape(1, OP)    # (1, OP)
    return wih_p, bias_p, whh_p, wfc_p, bfc_p


def lstm_model_forward(x, wih_p, bias_p, whh_p, wfc_p, bfc_p, *, output_size):
    """x: (B, S, I) batch_first f32; packed params from pack_lstm_params. -> (B, O)."""
    B, S, I = x.shape
    W, G = whh_p.shape
    OP = wfc_p.shape[1]

    # Tiny time-major transpose so the per-step xw load is a leading-axis index.
    x_tm = jnp.transpose(x.astype(jnp.float32), (1, 0, 2))                  # (S, B, I)

    out_padded = pl.pallas_call(
        lstm_fused_kernel,
        out_shape=jax.ShapeDtypeStruct((B, OP), jnp.float32),
        in_specs=[pl.BlockSpec(memory_space=pltpu.MemorySpace.VMEM)] * 6,
        out_specs=pl.BlockSpec(memory_space=pltpu.MemorySpace.VMEM),
        scratch_shapes=[pltpu.VMEM((S, B, G), jnp.float32)],
    )(x_tm, wih_p, bias_p, whh_p, wfc_p, bfc_p)

    return out_padded[:, :output_size]


def lstm_model_reference(x, wih, whh, b_ih, b_hh, wfc, bfc):
    """Pure-JAX reference matching torch.nn.LSTM + Linear semantics."""
    B, S, I = x.shape
    H = whh.shape[1]

    def step(carry, xt):
        h, c = carry
        gates = (jnp.dot(xt, wih.T, precision=lax.Precision.HIGHEST)
                 + jnp.dot(h, whh.T, precision=lax.Precision.HIGHEST)
                 + b_ih + b_hh)
        i_g = jax.nn.sigmoid(gates[:, 0 * H:1 * H])
        f_g = jax.nn.sigmoid(gates[:, 1 * H:2 * H])
        g_g = jnp.tanh(gates[:, 2 * H:3 * H])
        o_g = jax.nn.sigmoid(gates[:, 3 * H:4 * H])
        c = f_g * c + i_g * g_g
        h = o_g * jnp.tanh(c)
        return (h, c), h

    h0 = jnp.zeros((B, H), jnp.float32)
    c0 = jnp.zeros((B, H), jnp.float32)
    (h_last, _), _ = lax.scan(step, (h0, c0), jnp.transpose(x, (1, 0, 2)))
    return jnp.dot(h_last, wfc.T, precision=lax.Precision.HIGHEST) + bfc


if __name__ == "__main__":
    # Module config (defaults of LSTMModel): input_size=1, hidden=64, output=1.
    B, S, I, H, O = 8, 8, 1, 64, 1

    key = jax.random.PRNGKey(0)
    k = jax.random.split(key, 7)
    bound = 1.0 / jnp.sqrt(H)

    # PyTorch-shaped parameters (deterministic synthetic init).
    wih = jax.random.uniform(k[0], (4 * H, I), jnp.float32, -bound, bound)
    whh = jax.random.uniform(k[1], (4 * H, H), jnp.float32, -bound, bound)
    b_ih = jax.random.uniform(k[2], (4 * H,), jnp.float32, -bound, bound)
    b_hh = jax.random.uniform(k[3], (4 * H,), jnp.float32, -bound, bound)
    wfc = jax.random.uniform(k[4], (O, H), jnp.float32, -bound, bound)
    bfc = jax.random.uniform(k[5], (O,), jnp.float32, -bound, bound)

    x = jax.random.normal(k[6], (B, S, I), jnp.float32)

    # Pack/pad weights once, outside the jitted forward.
    packed = pack_lstm_params(wih, whh, b_ih, b_hh, wfc, bfc)

    fwd = jax.jit(lstm_model_forward, static_argnames=("output_size",))
    out = jax.block_until_ready(fwd(x, *packed, output_size=O))

    ref = lstm_model_reference(x, wih, whh, b_ih, b_hh, wfc, bfc)
    assert out.shape == (B, O), out.shape
    assert jnp.allclose(out, ref, atol=1e-4, rtol=1e-4), (out, ref)

    print("KERNEL_OK")
</pallas_src>

<mosaic_0001>
module attributes {stable_mosaic.version = 11 : i64} {
  func.func @lstm_fused_kernel(%arg0: memref<8x8x1xf32, #tpu.memory_space<vmem>>, %arg1: memref<1x256xf32, #tpu.memory_space<vmem>>, %arg2: memref<1x256xf32, #tpu.memory_space<vmem>>, %arg3: memref<128x256xf32, #tpu.memory_space<vmem>>, %arg4: memref<128x128xf32, #tpu.memory_space<vmem>>, %arg5: memref<1x128xf32, #tpu.memory_space<vmem>>, %arg6: memref<8x128xf32, #tpu.memory_space<vmem>>, %arg7: memref<8x8x256xf32, #tpu.memory_space<vmem>>) attributes {dimension_semantics = [], scalar_prefetch = 0 : i64, scratch_operands = 1 : i64, tpu.core_type = #tpu.core_type<tc>} {
    %c0 = arith.constant 0 : index
    %c0_0 = arith.constant 0 : index
    %0 = vector.load %arg3[%c0, %c0_0] : memref<128x256xf32, #tpu.memory_space<vmem>>, vector<128x256xf32>
    %c0_1 = arith.constant 0 : index
    %c0_2 = arith.constant 0 : index
    %1 = vector.load %arg2[%c0_1, %c0_2] : memref<1x256xf32, #tpu.memory_space<vmem>>, vector<1x256xf32>
    %2 = vector.shape_cast %1 : vector<1x256xf32> to vector<1x1x256xf32>
    %c0_3 = arith.constant 0 : index
    %c0_4 = arith.constant 0 : index
    %c0_5 = arith.constant 0 : index
    %3 = vector.load %arg0[%c0_3, %c0_4, %c0_5] : memref<8x8x1xf32, #tpu.memory_space<vmem>>, vector<8x8x1xf32>
    %c0_6 = arith.constant 0 : index
    %c0_7 = arith.constant 0 : index
    %4 = vector.load %arg1[%c0_6, %c0_7] : memref<1x256xf32, #tpu.memory_space<vmem>>, vector<1x256xf32>
    %5 = vector.shape_cast %4 : vector<1x256xf32> to vector<1x1x256xf32>
    %6 = vector.broadcast %3 : vector<8x8x1xf32> to vector<8x8x256xf32>
    %7 = vector.broadcast %5 : vector<1x1x256xf32> to vector<8x8x256xf32>
    %8 = arith.mulf %6, %7 : vector<8x8x256xf32>
    %9 = vector.broadcast %2 : vector<1x1x256xf32> to vector<8x8x256xf32>
    %10 = arith.addf %8, %9 : vector<8x8x256xf32>
    %c0_8 = arith.constant 0 : index
    %c0_9 = arith.constant 0 : index
    %c0_10 = arith.constant 0 : index
    %11 = vector.load %arg7[%c0_8, %c0_9, %c0_10] : memref<8x8x256xf32, #tpu.memory_space<vmem>>, vector<8x8x256xf32>
    tpu.vector_store %arg7[%c0_8, %c0_9, %c0_10], %10 {strides = array<i32>} : memref<8x8x256xf32, #tpu.memory_space<vmem>>, vector<8x8x256xf32>,
    %cst = arith.constant 0.000000e+00 : f32
    %12 = vector.broadcast %cst : f32 to vector<8x128xf32>
    %cst_11 = arith.constant 0.000000e+00 : f32
    %13 = vector.broadcast %cst_11 : f32 to vector<8x128xf32>
    %c0_i32 = arith.constant 0 : i32
    %cst_12 = arith.constant dense<0.000000e+00> : vector<8x256xf32>
    %14 = tpu.matmul %12, %0, %cst_12 {dimension_numbers = #tpu.dot_dimension_numbers<[1], [0], [0], [1], [0, 0, 1, 1], [], []>} : vector<8x128xf32>, vector<128x256xf32>, vector<8x256xf32> -> vector<8x256xf32>
    %15 = arith.index_cast %c0_i32 : i32 to index
    %c0_13 = arith.constant 0 : index
    %c0_14 = arith.constant 0 : index
    %16 = vector.load %arg7[%15, %c0_13, %c0_14] : memref<8x8x256xf32, #tpu.memory_space<vmem>>, vector<1x8x256xf32>
    %17 = vector.shape_cast %16 : vector<1x8x256xf32> to vector<8x256xf32>
    %18 = arith.addf %14, %17 : vector<8x256xf32>
    %19 = vector.extract_strided_slice %18 {offsets = [0, 0], sizes = [8, 128], strides = [1, 1]} : vector<8x256xf32> to vector<8x128xf32>
    %20 = vector.extract_strided_slice %18 {offsets = [0, 128], sizes = [8, 128], strides = [1, 1]} : vector<8x256xf32> to vector<8x128xf32>
    %21 = arith.negf %19 : vector<8x128xf32>
    %22 = math.exp %21 : vector<8x128xf32>
    %cst_15 = arith.constant 1.000000e+00 : f32
    %23 = vector.broadcast %cst_15 : f32 to vector<8x128xf32>
    %24 = arith.addf %23, %22 : vector<8x128xf32>
    %25 = arith.divf %23, %24 : vector<8x128xf32>
    %26 = math.tanh %20 : vector<8x128xf32>
    %27 = arith.negf %20 : vector<8x128xf32>
    %28 = math.exp %27 : vector<8x128xf32>
    %cst_16 = arith.constant 1.000000e+00 : f32
    %29 = vector.broadcast %cst_16 : f32 to vector<8x128xf32>
    %30 = arith.addf %29, %28 : vector<8x128xf32>
    %31 = arith.divf %29, %30 : vector<8x128xf32>
    %c64_i32 = arith.constant 64 : i32
    %32 = tpu.dynamic_rotate %25 by %c64_i32 dim 1 : vector<8x128xf32>, i32 -> vector<8x128xf32>
    %c64_i32_17 = arith.constant 64 : i32
    %33 = tpu.dynamic_rotate %31 by %c64_i32_17 dim 1 : vector<8x128xf32>, i32 -> vector<8x128xf32>
    %34 = arith.mulf %32, %13 : vector<8x128xf32>
    %35 = arith.mulf %25, %26 : vector<8x128xf32>
    %36 = arith.addf %34, %35 : vector<8x128xf32>
    %37 = math.tanh %36 : vector<8x128xf32>
    %38 = arith.mulf %33, %37 : vector<8x128xf32>
    %c1_i32 = arith.constant 1 : i32
    %cst_18 = arith.constant dense<0.000000e+00> : vector<8x256xf32>
    %39 = tpu.matmul %38, %0, %cst_18 {dimension_numbers = #tpu.dot_dimension_numbers<[1], [0], [0], [1], [0, 0, 1, 1], [], []>} : vector<8x128xf32>, vector<128x256xf32>, vector<8x256xf32> -> vector<8x256xf32>
    %40 = arith.index_cast %c1_i32 : i32 to index
    %c0_19 = arith.constant 0 : index
    %c0_20 = arith.constant 0 : index
    %41 = vector.load %arg7[%40, %c0_19, %c0_20] : memref<8x8x256xf32, #tpu.memory_space<vmem>>, vector<1x8x256xf32>
    %42 = vector.shape_cast %41 : vector<1x8x256xf32> to vector<8x256xf32>
    %43 = arith.addf %39, %42 : vector<8x256xf32>
    %44 = vector.extract_strided_slice %43 {offsets = [0, 0], sizes = [8, 128], strides = [1, 1]} : vector<8x256xf32> to vector<8x128xf32>
    %45 = vector.extract_strided_slice %43 {offsets = [0, 128], sizes = [8, 128], strides = [1, 1]} : vector<8x256xf32> to vector<8x128xf32>
    %46 = arith.negf %44 : vector<8x128xf32>
    %47 = math.exp %46 : vector<8x128xf32>
    %cst_21 = arith.constant 1.000000e+00 : f32
    %48 = vector.broadcast %cst_21 : f32 to vector<8x128xf32>
    %49 = arith.addf %48, %47 : vector<8x128xf32>
    %50 = arith.divf %48, %49 : vector<8x128xf32>
    %51 = math.tanh %45 : vector<8x128xf32>
    %52 = arith.negf %45 : vector<8x128xf32>
    %53 = math.exp %52 : vector<8x128xf32>
    %cst_22 = arith.constant 1.000000e+00 : f32
    %54 = vector.broadcast %cst_22 : f32 to vector<8x128xf32>
    %55 = arith.addf %54, %53 : vector<8x128xf32>
    %56 = arith.divf %54, %55 : vector<8x128xf32>
    %c64_i32_23 = arith.constant 64 : i32
    %57 = tpu.dynamic_rotate %50 by %c64_i32_23 dim 1 : vector<8x128xf32>, i32 -> vector<8x128xf32>
    %c64_i32_24 = arith.constant 64 : i32
    %58 = tpu.dynamic_rotate %56 by %c64_i32_24 dim 1 : vector<8x128xf32>, i32 -> vector<8x128xf32>
    %59 = arith.mulf %57, %36 : vector<8x128xf32>
    %60 = arith.mulf %50, %51 : vector<8x128xf32>
    %61 = arith.addf %59, %60 : vector<8x128xf32>
    %62 = math.tanh %61 : vector<8x128xf32>
    %63 = arith.mulf %58, %62 : vector<8x128xf32>
    %c2_i32 = arith.constant 2 : i32
    %cst_25 = arith.constant dense<0.000000e+00> : vector<8x256xf32>
    %64 = tpu.matmul %63, %0, %cst_25 {dimension_numbers = #tpu.dot_dimension_numbers<[1], [0], [0], [1], [0, 0, 1, 1], [], []>} : vector<8x128xf32>, vector<128x256xf32>, vector<8x256xf32> -> vector<8x256xf32>
    %65 = arith.index_cast %c2_i32 : i32 to index
    %c0_26 = arith.constant 0 : index
    %c0_27 = arith.constant 0 : index
    %66 = vector.load %arg7[%65, %c0_26, %c0_27] : memref<8x8x256xf32, #tpu.memory_space<vmem>>, vector<1x8x256xf32>
    %67 = vector.shape_cast %66 : vector<1x8x256xf32> to vector<8x256xf32>
    %68 = arith.addf %64, %67 : vector<8x256xf32>
    %69 = vector.extract_strided_slice %68 {offsets = [0, 0], sizes = [8, 128], strides = [1, 1]} : vector<8x256xf32> to vector<8x128xf32>
    %70 = vector.extract_strided_slice %68 {offsets = [0, 128], sizes = [8, 128], strides = [1, 1]} : vector<8x256xf32> to vector<8x128xf32>
    %71 = arith.negf %69 : vector<8x128xf32>
    %72 = math.exp %71 : vector<8x128xf32>
    %cst_28 = arith.constant 1.000000e+00 : f32
    %73 = vector.broadcast %cst_28 : f32 to vector<8x128xf32>
    %74 = arith.addf %73, %72 : vector<8x128xf32>
    %75 = arith.divf %73, %74 : vector<8x128xf32>
    %76 = math.tanh %70 : vector<8x128xf32>
    %77 = arith.negf %70 : vector<8x128xf32>
    %78 = math.exp %77 : vector<8x128xf32>
    %cst_29 = arith.constant 1.000000e+00 : f32
    %79 = vector.broadcast %cst_29 : f32 to vector<8x128xf32>
    %80 = arith.addf %79, %78 : vector<8x128xf32>
    %81 = arith.divf %79, %80 : vector<8x128xf32>
    %c64_i32_30 = arith.constant 64 : i32
    %82 = tpu.dynamic_rotate %75 by %c64_i32_30 dim 1 : vector<8x128xf32>, i32 -> vector<8x128xf32>
    %c64_i32_31 = arith.constant 64 : i32
    %83 = tpu.dynamic_rotate %81 by %c64_i32_31 dim 1 : vector<8x128xf32>, i32 -> vector<8x128xf32>
    %84 = arith.mulf %82, %61 : vector<8x128xf32>
    %85 = arith.mulf %75, %76 : vector<8x128xf32>
    %86 = arith.addf %84, %85 : vector<8x128xf32>
    %87 = math.tanh %86 : vector<8x128xf32>
    %88 = arith.mulf %83, %87 : vector<8x128xf32>
    %c3_i32 = arith.constant 3 : i32
    %cst_32 = arith.constant dense<0.000000e+00> : vector<8x256xf32>
    %89 = tpu.matmul %88, %0, %cst_32 {dimension_numbers = #tpu.dot_dimension_numbers<[1], [0], [0], [1], [0, 0, 1, 1], [], []>} : vector<8x128xf32>, vector<128x256xf32>, vector<8x256xf32> -> vector<8x256xf32>
    %90 = arith.index_cast %c3_i32 : i32 to index
    %c0_33 = arith.constant 0 : index
    %c0_34 = arith.constant 0 : index
    %91 = vector.load %arg7[%90, %c0_33, %c0_34] : memref<8x8x256xf32, #tpu.memory_space<vmem>>, vector<1x8x256xf32>
    %92 = vector.shape_cast %91 : vector<1x8x256xf32> to vector<8x256xf32>
    %93 = arith.addf %89, %92 : vector<8x256xf32>
    %94 = vector.extract_strided_slice %93 {offsets = [0, 0], sizes = [8, 128], strides = [1, 1]} : vector<8x256xf32> to vector<8x128xf32>
    %95 = vector.extract_strided_slice %93 {offsets = [0, 128], sizes = [8, 128], strides = [1, 1]} : vector<8x256xf32> to vector<8x128xf32>
    %96 = arith.negf %94 : vector<8x128xf32>
    %97 = math.exp %96 : vector<8x128xf32>
    %cst_35 = arith.constant 1.000000e+00 : f32
    %98 = vector.broadcast %cst_35 : f32 to vector<8x128xf32>
    %99 = arith.addf %98, %97 : vector<8x128xf32>
    %100 = arith.divf %98, %99 : vector<8x128xf32>
    %101 = math.tanh %95 : vector<8x128xf32>
    %102 = arith.negf %95 : vector<8x128xf32>
    %103 = math.exp %102 : vector<8x128xf32>
    %cst_36 = arith.constant 1.000000e+00 : f32
    %104 = vector.broadcast %cst_36 : f32 to vector<8x128xf32>
    %105 = arith.addf %104, %103 : vector<8x128xf32>
    %106 = arith.divf %104, %105 : vector<8x128xf32>
    %c64_i32_37 = arith.constant 64 : i32
    %107 = tpu.dynamic_rotate %100 by %c64_i32_37 dim 1 : vector<8x128xf32>, i32 -> vector<8x128xf32>
    %c64_i32_38 = arith.constant 64 : i32
    %108 = tpu.dynamic_rotate %106 by %c64_i32_38 dim 1 : vector<8x128xf32>, i32 -> vector<8x128xf32>
    %109 = arith.mulf %107, %86 : vector<8x128xf32>
    %110 = arith.mulf %100, %101 : vector<8x128xf32>
    %111 = arith.addf %109, %110 : vector<8x128xf32>
    %112 = math.tanh %111 : vector<8x128xf32>
    %113 = arith.mulf %108, %112 : vector<8x128xf32>
    %c4_i32 = arith.constant 4 : i32
    %cst_39 = arith.constant dense<0.000000e+00> : vector<8x256xf32>
    %114 = tpu.matmul %113, %0, %cst_39 {dimension_numbers = #tpu.dot_dimension_numbers<[1], [0], [0], [1], [0, 0, 1, 1], [], []>} : vector<8x128xf32>, vector<128x256xf32>, vector<8x256xf32> -> vector<8x256xf32>
    %115 = arith.index_cast %c4_i32 : i32 to index
    %c0_40 = arith.constant 0 : index
    %c0_41 = arith.constant 0 : index
    %116 = vector.load %arg7[%115, %c0_40, %c0_41] : memref<8x8x256xf32, #tpu.memory_space<vmem>>, vector<1x8x256xf32>
    %117 = vector.shape_cast %116 : vector<1x8x256xf32> to vector<8x256xf32>
    %118 = arith.addf %114, %117 : vector<8x256xf32>
    %119 = vector.extract_strided_slice %118 {offsets = [0, 0], sizes = [8, 128], strides = [1, 1]} : vector<8x256xf32> to vector<8x128xf32>
    %120 = vector.extract_strided_slice %118 {offsets = [0, 128], sizes = [8, 128], strides = [1, 1]} : vector<8x256xf32> to vector<8x128xf32>
    %121 = arith.negf %119 : vector<8x128xf32>
    %122 = math.exp %121 : vector<8x128xf32>
    %cst_42 = arith.constant 1.000000e+00 : f32
    %123 = vector.broadcast %cst_42 : f32 to vector<8x128xf32>
    %124 = arith.addf %123, %122 : vector<8x128xf32>
    %125 = arith.divf %123, %124 : vector<8x128xf32>
    %126 = math.tanh %120 : vector<8x128xf32>
    %127 = arith.negf %120 : vector<8x128xf32>
    %128 = math.exp %127 : vector<8x128xf32>
    %cst_43 = arith.constant 1.000000e+00 : f32
    %129 = vector.broadcast %cst_43 : f32 to vector<8x128xf32>
    %130 = arith.addf %129, %128 : vector<8x128xf32>
    %131 = arith.divf %129, %130 : vector<8x128xf32>
    %c64_i32_44 = arith.constant 64 : i32
    %132 = tpu.dynamic_rotate %125 by %c64_i32_44 dim 1 : vector<8x128xf32>, i32 -> vector<8x128xf32>
    %c64_i32_45 = arith.constant 64 : i32
    %133 = tpu.dynamic_rotate %131 by %c64_i32_45 dim 1 : vector<8x128xf32>, i32 -> vector<8x128xf32>
    %134 = arith.mulf %132, %111 : vector<8x128xf32>
    %135 = arith.mulf %125, %126 : vector<8x128xf32>
    %136 = arith.addf %134, %135 : vector<8x128xf32>
    %137 = math.tanh %136 : vector<8x128xf32>
    %138 = arith.mulf %133, %137 : vector<8x128xf32>
    %c5_i32 = arith.constant 5 : i32
    %cst_46 = arith.constant dense<0.000000e+00> : vector<8x256xf32>
    %139 = tpu.matmul %138, %0, %cst_46 {dimension_numbers = #tpu.dot_dimension_numbers<[1], [0], [0], [1], [0, 0, 1, 1], [], []>} : vector<8x128xf32>, vector<128x256xf32>, vector<8x256xf32> -> vector<8x256xf32>
    %140 = arith.index_cast %c5_i32 : i32 to index
    %c0_47 = arith.constant 0 : index
    %c0_48 = arith.constant 0 : index
    %141 = vector.load %arg7[%140, %c0_47, %c0_48] : memref<8x8x256xf32, #tpu.memory_space<vmem>>, vector<1x8x256xf32>
    %142 = vector.shape_cast %141 : vector<1x8x256xf32> to vector<8x256xf32>
    %143 = arith.addf %139, %142 : vector<8x256xf32>
    %144 = vector.extract_strided_slice %143 {offsets = [0, 0], sizes = [8, 128], strides = [1, 1]} : vector<8x256xf32> to vector<8x128xf32>
    %145 = vector.extract_strided_slice %143 {offsets = [0, 128], sizes = [8, 128], strides = [1, 1]} : vector<8x256xf32> to vector<8x128xf32>
    %146 = arith.negf %144 : vector<8x128xf32>
    %147 = math.exp %146 : vector<8x128xf32>
    %cst_49 = arith.constant 1.000000e+00 : f32
    %148 = vector.broadcast %cst_49 : f32 to vector<8x128xf32>
    %149 = arith.addf %148, %147 : vector<8x128xf32>
    %150 = arith.divf %148, %149 : vector<8x128xf32>
    %151 = math.tanh %145 : vector<8x128xf32>
    %152 = arith.negf %145 : vector<8x128xf32>
    %153 = math.exp %152 : vector<8x128xf32>
    %cst_50 = arith.constant 1.000000e+00 : f32
    %154 = vector.broadcast %cst_50 : f32 to vector<8x128xf32>
    %155 = arith.addf %154, %153 : vector<8x128xf32>
    %156 = arith.divf %154, %155 : vector<8x128xf32>
    %c64_i32_51 = arith.constant 64 : i32
    %157 = tpu.dynamic_rotate %150 by %c64_i32_51 dim 1 : vector<8x128xf32>, i32 -> vector<8x128xf32>
    %c64_i32_52 = arith.constant 64 : i32
    %158 = tpu.dynamic_rotate %156 by %c64_i32_52 dim 1 : vector<8x128xf32>, i32 -> vector<8x128xf32>
    %159 = arith.mulf %157, %136 : vector<8x128xf32>
    %160 = arith.mulf %150, %151 : vector<8x128xf32>
    %161 = arith.addf %159, %160 : vector<8x128xf32>
    %162 = math.tanh %161 : vector<8x128xf32>
    %163 = arith.mulf %158, %162 : vector<8x128xf32>
    %c6_i32 = arith.constant 6 : i32
    %cst_53 = arith.constant dense<0.000000e+00> : vector<8x256xf32>
    %164 = tpu.matmul %163, %0, %cst_53 {dimension_numbers = #tpu.dot_dimension_numbers<[1], [0], [0], [1], [0, 0, 1, 1], [], []>} : vector<8x128xf32>, vector<128x256xf32>, vector<8x256xf32> -> vector<8x256xf32>
    %165 = arith.index_cast %c6_i32 : i32 to index
    %c0_54 = arith.constant 0 : index
    %c0_55 = arith.constant 0 : index
    %166 = vector.load %arg7[%165, %c0_54, %c0_55] : memref<8x8x256xf32, #tpu.memory_space<vmem>>, vector<1x8x256xf32>
    %167 = vector.shape_cast %166 : vector<1x8x256xf32> to vector<8x256xf32>
    %168 = arith.addf %164, %167 : vector<8x256xf32>
    %169 = vector.extract_strided_slice %168 {offsets = [0, 0], sizes = [8, 128], strides = [1, 1]} : vector<8x256xf32> to vector<8x128xf32>
    %170 = vector.extract_strided_slice %168 {offsets = [0, 128], sizes = [8, 128], strides = [1, 1]} : vector<8x256xf32> to vector<8x128xf32>
    %171 = arith.negf %169 : vector<8x128xf32>
    %172 = math.exp %171 : vector<8x128xf32>
    %cst_56 = arith.constant 1.000000e+00 : f32
    %173 = vector.broadcast %cst_56 : f32 to vector<8x128xf32>
    %174 = arith.addf %173, %172 : vector<8x128xf32>
    %175 = arith.divf %173, %174 : vector<8x128xf32>
    %176 = math.tanh %170 : vector<8x128xf32>
    %177 = arith.negf %170 : vector<8x128xf32>
    %178 = math.exp %177 : vector<8x128xf32>
    %cst_57 = arith.constant 1.000000e+00 : f32
    %179 = vector.broadcast %cst_57 : f32 to vector<8x128xf32>
    %180 = arith.addf %179, %178 : vector<8x128xf32>
    %181 = arith.divf %179, %180 : vector<8x128xf32>
    %c64_i32_58 = arith.constant 64 : i32
    %182 = tpu.dynamic_rotate %175 by %c64_i32_58 dim 1 : vector<8x128xf32>, i32 -> vector<8x128xf32>
    %c64_i32_59 = arith.constant 64 : i32
    %183 = tpu.dynamic_rotate %181 by %c64_i32_59 dim 1 : vector<8x128xf32>, i32 -> vector<8x128xf32>
    %184 = arith.mulf %182, %161 : vector<8x128xf32>
    %185 = arith.mulf %175, %176 : vector<8x128xf32>
    %186 = arith.addf %184, %185 : vector<8x128xf32>
    %187 = math.tanh %186 : vector<8x128xf32>
    %188 = arith.mulf %183, %187 : vector<8x128xf32>
    %c7_i32 = arith.constant 7 : i32
    %cst_60 = arith.constant dense<0.000000e+00> : vector<8x256xf32>
    %189 = tpu.matmul %188, %0, %cst_60 {dimension_numbers = #tpu.dot_dimension_numbers<[1], [0], [0], [1], [0, 0, 1, 1], [], []>} : vector<8x128xf32>, vector<128x256xf32>, vector<8x256xf32> -> vector<8x256xf32>
    %190 = arith.index_cast %c7_i32 : i32 to index
    %c0_61 = arith.constant 0 : index
    %c0_62 = arith.constant 0 : index
    %191 = vector.load %arg7[%190, %c0_61, %c0_62] : memref<8x8x256xf32, #tpu.memory_space<vmem>>, vector<1x8x256xf32>
    %192 = vector.shape_cast %191 : vector<1x8x256xf32> to vector<8x256xf32>
    %193 = arith.addf %189, %192 : vector<8x256xf32>
    %194 = vector.extract_strided_slice %193 {offsets = [0, 0], sizes = [8, 128], strides = [1, 1]} : vector<8x256xf32> to vector<8x128xf32>
    %195 = vector.extract_strided_slice %193 {offsets = [0, 128], sizes = [8, 128], strides = [1, 1]} : vector<8x256xf32> to vector<8x128xf32>
    %196 = arith.negf %194 : vector<8x128xf32>
    %197 = math.exp %196 : vector<8x128xf32>
    %cst_63 = arith.constant 1.000000e+00 : f32
    %198 = vector.broadcast %cst_63 : f32 to vector<8x128xf32>
    %199 = arith.addf %198, %197 : vector<8x128xf32>
    %200 = arith.divf %198, %199 : vector<8x128xf32>
    %201 = math.tanh %195 : vector<8x128xf32>
    %202 = arith.negf %195 : vector<8x128xf32>
    %203 = math.exp %202 : vector<8x128xf32>
    %cst_64 = arith.constant 1.000000e+00 : f32
    %204 = vector.broadcast %cst_64 : f32 to vector<8x128xf32>
    %205 = arith.addf %204, %203 : vector<8x128xf32>
    %206 = arith.divf %204, %205 : vector<8x128xf32>
    %c64_i32_65 = arith.constant 64 : i32
    %207 = tpu.dynamic_rotate %200 by %c64_i32_65 dim 1 : vector<8x128xf32>, i32 -> vector<8x128xf32>
    %c64_i32_66 = arith.constant 64 : i32
    %208 = tpu.dynamic_rotate %206 by %c64_i32_66 dim 1 : vector<8x128xf32>, i32 -> vector<8x128xf32>
    %209 = arith.mulf %207, %186 : vector<8x128xf32>
    %210 = arith.mulf %200, %201 : vector<8x128xf32>
    %211 = arith.addf %209, %210 : vector<8x128xf32>
    %212 = math.tanh %211 : vector<8x128xf32>
    %213 = arith.mulf %208, %212 : vector<8x128xf32>
    %c8_i32 = arith.constant 8 : i32
    %c0_67 = arith.constant 0 : index
    %c0_68 = arith.constant 0 : index
    %214 = vector.load %arg4[%c0_67, %c0_68] : memref<128x128xf32, #tpu.memory_space<vmem>>, vector<128x128xf32>
    %cst_69 = arith.constant dense<0.000000e+00> : vector<8x128xf32>
    %215 = tpu.matmul %213, %214, %cst_69 {dimension_numbers = #tpu.dot_dimension_numbers<[1], [0], [0], [1], [0, 0, 1, 1], [], []>} : vector<8x128xf32>, vector<128x128xf32>, vector<8x128xf32> -> vector<8x128xf32>
    %c0_70 = arith.constant 0 : index
    %c0_71 = arith.constant 0 : index
    %216 = vector.load %arg5[%c0_70, %c0_71] : memref<1x128xf32, #tpu.memory_space<vmem>>, vector<1x128xf32>
    %217 = vector.broadcast %216 : vector<1x128xf32> to vector<8x128xf32>
    %218 = arith.addf %215, %217 : vector<8x128xf32>
    %c0_72 = arith.constant 0 : index
    %c0_73 = arith.constant 0 : index
    %219 = vector.load %arg6[%c0_72, %c0_73] : memref<8x128xf32, #tpu.memory_space<vmem>>, vector<8x128xf32>
    tpu.vector_store %arg6[%c0_72, %c0_73], %218 {strides = array<i32>} : memref<8x128xf32, #tpu.memory_space<vmem>>, vector<8x128xf32>,
    return
  }
}

</mosaic_0001>

<llo_original>
// kernel: lstm_model_forward.1
$region0: #{lstm_model_forward.1}
  #allocation0 [shape = 'u32[]', space=smem, size = 0x4, offset = 0x4, fixed_abs, tag = 'smem constant byte address 0x4 - core index']
  #allocation1 [shape = 'u32[72,128]{1,0:T(1,128)}', space=vmem, size = 0x9000, scoped, tag = 'internal scratch']
  #allocation2 [shape = 'f32[8,8,256]{2,1,0:T(8,128)}', space=vmem, size = 0x10000, scoped, tag = 'scratch operand']
  %s0 = inlined_call_operand.vmem [shape: f32[8,8,1], index: 0, kind: input, shape index: {}]
  %s1 = inlined_call_operand.vmem [shape: f32[1,256], index: 1, kind: input, shape index: {}]
  %s2 = inlined_call_operand.vmem [shape: f32[1,256], index: 2, kind: input, shape index: {}]
  %s3 = inlined_call_operand.hbm [shape: f32[128,256], index: 3, kind: input, shape index: {}]
  %s4 = inlined_call_operand.hbm [shape: f32[128,128], index: 4, kind: input, shape index: {}]
  %s5 = inlined_call_operand.vmem [shape: f32[1,128], index: 5, kind: input, shape index: {}]
  %s6 = inlined_call_operand.vmem [shape: f32[8,128], index: 6, kind: output, shape index: {}]
  %s7 = sld [smem:[#allocation0]]
  $region42: #{lstm_model_forward.1} parent=0
    _
  %s9 = ssub.s32 1, %s7
  %s10 = scalar_select 0, %s9, %s7
  $region1: #{lstm_model_forward.1} parent=0
    #allocation3 [shape = 'u8[131072]{0}', space=vmem, size = 0x20000, scoped, tag = 'input window, operand 3, single buffered']
    #allocation4 [shape = 's32[1]{0}', space=sflag, size = 0x4, scoped, tag = 'scoped memory for lstm_model_forward.1']
    #allocation5 [shape = 'u8[65536]{0}', space=vmem, size = 0x10000, scoped, tag = 'input window, operand 4, single buffered']
    #allocation6 [shape = 's32[1]{0}', space=sflag, size = 0x4, scoped, tag = 'scoped memory for lstm_model_forward.1']
    %11 = vsyncpa [#allocation4], 0
    %12 = vsyncpa [#allocation6], 0
    // Predicated region
    $region2: #{lstm_model_forward.1} parent=1 // pred_check
      _
    $region3: #{lstm_model_forward.1} parent=1 // pred_check_branch
      %14 = sbr.rel (0) target = $region5
    $region4: #{lstm_model_forward.1} parent=1 // pred_region
      _
    $region5: #{lstm_model_forward.1} parent=1 // pred_fallthru
      _
    // Predicated region
    $region6: #{lstm_model_forward.1} parent=1 // pred_check
      _
    $region7: #{lstm_model_forward.1} parent=1 // pred_check_branch
      %16 = sbr.rel (0) target = $region9
    $region8: #{lstm_model_forward.1} parent=1 // pred_region
      _
    $region9: #{lstm_model_forward.1} parent=1 // pred_fallthru
      _
    // Predicated region
    $region10: #{lstm_model_forward.1} parent=1 // pred_check
      _
    $region11: #{lstm_model_forward.1} parent=1 // pred_check_branch
      %18 = sbr.rel (0) target = $region13
    $region12: #{lstm_model_forward.1} parent=1 // pred_region
      _
    $region13: #{lstm_model_forward.1} parent=1 // pred_fallthru
      _
    // Predicated region
    $region14: #{lstm_model_forward.1} parent=1 // pred_check
      _
    $region15: #{lstm_model_forward.1} parent=1 // pred_check_branch
      %20 = sbr.rel (0) target = $region17
    $region16: #{lstm_model_forward.1} parent=1 // pred_region
      %22 = vsyncadd [#allocation4], 0
      %s23 = sshll.u32 %s3, 4
      %s24 = int_to_ptr.hbm [resolvable:$true] %s23
      %s25 = sshll.u32 [#allocation3], 4
      %s26 = int_to_ptr.vmem [resolvable:$true] %s25
      %31 = dma.hbm_to_vmem [thread:$0]  %s24, 4096, %s26, [#allocation4], 256, 256, 16
    $region17: #{lstm_model_forward.1} parent=1 // pred_fallthru
      _
    // Predicated region
    $region18: #{lstm_model_forward.1} parent=1 // pred_check
      _
    $region19: #{lstm_model_forward.1} parent=1 // pred_check_branch
      %33 = sbr.rel (0) target = $region21
    $region20: #{lstm_model_forward.1} parent=1 // pred_region
      %35 = vsyncadd [#allocation6], 0
      %s36 = sshll.u32 %s4, 4
      %s37 = int_to_ptr.hbm [resolvable:$true] %s36
      %s38 = sshll.u32 [#allocation5], 4
      %s39 = int_to_ptr.vmem [resolvable:$true] %s38
      %44 = dma.hbm_to_vmem [thread:$0]  %s37, 2048, %s39, [#allocation6], 128, 128, 8
    $region21: #{lstm_model_forward.1} parent=1 // pred_fallthru
      _
    // Predicated region
    $region22: #{lstm_model_forward.1} parent=1 // pred_check
      _
    $region23: #{lstm_model_forward.1} parent=1 // pred_check_branch
      %46 = sbr.rel (0) target = $region25
    $region24: #{lstm_model_forward.1} parent=1 // pred_region
      _
    $region25: #{lstm_model_forward.1} parent=1 // pred_fallthru
      _
    // Predicated region
    $region26: #{lstm_model_forward.1} parent=1 // pred_check
      _
    $region27: #{lstm_model_forward.1} parent=1 // pred_check_branch
      %48 = sbr.rel (0) target = $region29
    $region28: #{lstm_model_forward.1} parent=1 // pred_region
      %50 = dma.done [#allocation4], 4096
    $region29: #{lstm_model_forward.1} parent=1 // pred_fallthru
      _
    // Predicated region
    $region30: #{lstm_model_forward.1} parent=1 // pred_check
      _
    $region31: #{lstm_model_forward.1} parent=1 // pred_check_branch
      %52 = sbr.rel (0) target = $region33
    $region32: #{lstm_model_forward.1} parent=1 // pred_region
      %54 = dma.done [#allocation6], 2048
    $region33: #{lstm_model_forward.1} parent=1 // pred_fallthru
      _
    %v55 = vld [vmem:[#allocation3] sm:$0xff]
    %v56 = vld [vmem:[#allocation3 + $0x8] sm:$0xff]
    %v57 = vld [vmem:[#allocation3 + $0x10] sm:$0xff]
    %v58 = vld [vmem:[#allocation3 + $0x18] sm:$0xff]
    %v59 = vld [vmem:[#allocation3 + $0x20] sm:$0xff]
    %v60 = vld [vmem:[#allocation3 + $0x28] sm:$0xff]
    %v61 = vld [vmem:[#allocation3 + $0x30] sm:$0xff]
    %v62 = vld [vmem:[#allocation3 + $0x38] sm:$0xff]
    %v63 = vld [vmem:[#allocation3 + $0x40] sm:$0xff]
    %v64 = vld [vmem:[#allocation3 + $0x48] sm:$0xff]
    %v65 = vld [vmem:[#allocation3 + $0x50] sm:$0xff]
    %v66 = vld [vmem:[#allocation3 + $0x58] sm:$0xff]
    %v67 = vld [vmem:[#allocation3 + $0x60] sm:$0xff]
    %v68 = vld [vmem:[#allocation3 + $0x68] sm:$0xff]
    %v69 = vld [vmem:[#allocation3 + $0x70] sm:$0xff]
    %v70 = vld [vmem:[#allocation3 + $0x78] sm:$0xff]
    %v71 = vld [vmem:[#allocation3 + $0x80] sm:$0xff]
    %v72 = vld [vmem:[#allocation3 + $0x88] sm:$0xff]
    %v73 = vld [vmem:[#allocation3 + $0x90] sm:$0xff]
    %v74 = vld [vmem:[#allocation3 + $0x98] sm:$0xff]
    %v75 = vld [vmem:[#allocation3 + $0xa0] sm:$0xff]
    %v76 = vld [vmem:[#allocation3 + $0xa8] sm:$0xff]
    %v77 = vld [vmem:[#allocation3 + $0xb0] sm:$0xff]
    %v78 = vld [vmem:[#allocation3 + $0xb8] sm:$0xff]
    %v79 = vld [vmem:[#allocation3 + $0xc0] sm:$0xff]
    %v80 = vld [vmem:[#allocation3 + $0xc8] sm:$0xff]
    %v81 = vld [vmem:[#allocation3 + $0xd0] sm:$0xff]
    %v82 = vld [vmem:[#allocation3 + $0xd8] sm:$0xff]
    %v83 = vld [vmem:[#allocation3 + $0xe0] sm:$0xff]
    %v84 = vld [vmem:[#allocation3 + $0xe8] sm:$0xff]
    %v85 = vld [vmem:[#allocation3 + $0xf0] sm:$0xff]
    %v86 = vld [vmem:[#allocation3 + $0xf8] sm:$0xff]
    %v87 = vld [vmem:[%s2] sm:$0x3]
    %v88 = vld [vmem:[%s0] sm:$0xff]
    %v89 = vld [vmem:[%s0 + $0x8] sm:$0xff]
    %v90 = vld [vmem:[%s0 + $0x10] sm:$0xff]
    %v91 = vld [vmem:[%s0 + $0x18] sm:$0xff]
    %v92 = vld [vmem:[%s0 + $0x20] sm:$0xff]
    %v93 = vld [vmem:[%s0 + $0x28] sm:$0xff]
    %v94 = vld [vmem:[%s0 + $0x30] sm:$0xff]
    %v95 = vld [vmem:[%s0 + $0x38] sm:$0xff]
    %v96 = vld [vmem:[%s1] sm:$0x3]
    %98 = vset.pattern.permute.xlu0 0
    %99 = vperm.xlu0 %98, %v88
    %v100 = vpop.permute.xlu0 %99
    %103 = vset.pattern.permute.xlu0 0
    %104 = vperm.xlu0 %103, %v89
    %v105 = vpop.permute.xlu0 %104
    %108 = vset.pattern.permute.xlu0 0
    %109 = vperm.xlu0 %108, %v90
    %v110 = vpop.permute.xlu0 %109
    %113 = vset.pattern.permute.xlu0 0
    %114 = vperm.xlu0 %113, %v91
    %v115 = vpop.permute.xlu0 %114
    %118 = vset.pattern.permute.xlu0 0
    %119 = vperm.xlu0 %118, %v92
    %v120 = vpop.permute.xlu0 %119
    %123 = vset.pattern.permute.xlu0 0
    %124 = vperm.xlu0 %123, %v93
    %v125 = vpop.permute.xlu0 %124
    %128 = vset.pattern.permute.xlu0 0
    %129 = vperm.xlu0 %128, %v94
    %v130 = vpop.permute.xlu0 %129
    %133 = vset.pattern.permute.xlu0 0
    %134 = vperm.xlu0 %133, %v95
    %v135 = vpop.permute.xlu0 %134
    %v138 = vperm.slane %v96, 0
    %v139 = vperm.slane %v96, 1
    %v142 = vmul.f32 %v100, %v138
    %v143 = vmul.f32 %v100, %v139
    %v144 = vmul.f32 %v105, %v138
    %v145 = vmul.f32 %v105, %v139
    %v146 = vmul.f32 %v110, %v138
    %v147 = vmul.f32 %v110, %v139
    %v148 = vmul.f32 %v115, %v138
    %v149 = vmul.f32 %v115, %v139
    %v150 = vmul.f32 %v120, %v138
    %v151 = vmul.f32 %v120, %v139
    %v152 = vmul.f32 %v125, %v138
    %v153 = vmul.f32 %v125, %v139
    %v154 = vmul.f32 %v130, %v138
    %v155 = vmul.f32 %v130, %v139
    %v156 = vmul.f32 %v135, %v138
    %v157 = vmul.f32 %v135, %v139
    %v159 = vperm.slane %v87, 0
    %v160 = vperm.slane %v87, 1
    %v163 = vadd.f32 %v142, %v159
    %v164 = vadd.f32 %v143, %v160
    %v165 = vadd.f32 %v144, %v159
    %v166 = vadd.f32 %v145, %v160
    %v167 = vadd.f32 %v146, %v159
    %v168 = vadd.f32 %v147, %v160
    %v169 = vadd.f32 %v148, %v159
    %v170 = vadd.f32 %v149, %v160
    %v171 = vadd.f32 %v150, %v159
    %v172 = vadd.f32 %v151, %v160
    %v173 = vadd.f32 %v152, %v159
    %v174 = vadd.f32 %v153, %v160
    %v175 = vadd.f32 %v154, %v159
    %v176 = vadd.f32 %v155, %v160
    %v177 = vadd.f32 %v156, %v159
    %v178 = vadd.f32 %v157, %v160
    %179 = vst [vmem:[#allocation2] sm:$0xff] %v163
    %180 = vst [vmem:[#allocation2 + $0x8] sm:$0xff] %v164
    %181 = vst [vmem:[#allocation2 + $0x10] sm:$0xff] %v165
    %182 = vst [vmem:[#allocation2 + $0x18] sm:$0xff] %v166
    %183 = vst [vmem:[#allocation2 + $0x20] sm:$0xff] %v167
    %184 = vst [vmem:[#allocation2 + $0x28] sm:$0xff] %v168
    %185 = vst [vmem:[#allocation2 + $0x30] sm:$0xff] %v169
    %186 = vst [vmem:[#allocation2 + $0x38] sm:$0xff] %v170
    %187 = vst [vmem:[#allocation2 + $0x40] sm:$0xff] %v171
    %188 = vst [vmem:[#allocation2 + $0x48] sm:$0xff] %v172
    %189 = vst [vmem:[#allocation2 + $0x50] sm:$0xff] %v173
    %190 = vst [vmem:[#allocation2 + $0x58] sm:$0xff] %v174
    %191 = vst [vmem:[#allocation2 + $0x60] sm:$0xff] %v175
    %192 = vst [vmem:[#allocation2 + $0x68] sm:$0xff] %v176
    %193 = vst [vmem:[#allocation2 + $0x70] sm:$0xff] %v177
    %194 = vst [vmem:[#allocation2 + $0x78] sm:$0xff] %v178
    %v195 = vld [vmem:[#allocation2] sm:$0xff]
    %v196 = vld [vmem:[#allocation2 + $0x8] sm:$0xff]
    %197 = vmatpush.msra.mxu0 %v85
    %198 = vmatpush.msra.mxu0 %v83
    %199 = vmatpush.msra.mxu0 %v81
    %200 = vmatpush.msra.mxu0 %v79
    %201 = vmatpush.msra.mxu0 %v77
    %202 = vmatpush.msra.mxu0 %v75
    %203 = vmatpush.msra.mxu0 %v73
    %204 = vmatpush.msra.mxu0 %v71
    %205 = vmatpush.msra.mxu0 %v69
    %206 = vmatpush.msra.mxu0 %v67
    %207 = vmatpush.msra.mxu0 %v65
    %208 = vmatpush.msra.mxu0 %v63
    %209 = vmatpush.msra.mxu0 %v61
    %210 = vmatpush.msra.mxu0 %v59
    %211 = vmatpush.msra.mxu0 %v57
    %212 = vmatpush.msra.mxu0 %v55
    %213 = vmatmul.f32.gmra.mxu0 0.0
    %v214 = vpop.f32.mrf.mxu0
    %v215 = vadd.f32 %v195, %v214
    %216 = vdwg.mxu0
    %217 = vmatpush.msra.mxu0 %v86
    %218 = vmatpush.msra.mxu0 %v84
    %219 = vmatpush.msra.mxu0 %v82
    %220 = vmatpush.msra.mxu0 %v80
    %221 = vmatpush.msra.mxu0 %v78
    %222 = vmatpush.msra.mxu0 %v76
    %223 = vmatpush.msra.mxu0 %v74
    %224 = vmatpush.msra.mxu0 %v72
    %225 = vmatpush.msra.mxu0 %v70
    %226 = vmatpush.msra.mxu0 %v68
    %227 = vmatpush.msra.mxu0 %v66
    %228 = vmatpush.msra.mxu0 %v64
    %229 = vmatpush.msra.mxu0 %v62
    %230 = vmatpush.msra.mxu0 %v60
    %231 = vmatpush.msra.mxu0 %v58
    %232 = vmatpush.msra.mxu0 %v56
    %233 = vmatmul.f32.gmra.mxu0 0.0
    %v234 = vpop.f32.mrf.mxu0
    %v235 = vadd.f32 %v196, %v234
    %236 = vdwg.mxu0
    %v237 = vxor.u32 %v215, 2147483648
    %v238 = vmul.f32 %v237, 1.442695
    %v239 = vpow.pop %v238
    %v240 = vadd.f32 %v239, 1.0
    %v241 = vrcp.pop %v240
    %v242 = vmul.f32 %v240, %v241
    %v243 = vsub.f32 1.0, %v242
    %v244 = vmul.f32 %v241, %v243
    %v245 = vadd.f32 %v241, %v244
    %vm246 = vweird.f32 %v240
    %vm247 = vweird.f32 %v241
    %vm248 = vmor %vm246, %vm247
    %v249 = vsel %vm248, %v241, %v245
    %v250 = vand.u32 2147483647, %v240
    %vm251 = vcmp.eq.f32.partialorder %v250, 8.507059e+37
    %v252 = vand.u32 %v240, 2147483648
    %v253 = vor.u32 1.1754944e-38, %v252
    %v254 = vsel %vm251, %v253, %v249
    %v255 = vmul.f32 1.0, %v254
    %v256 = vtanh.pop %v235
    %v257 = vxor.u32 %v235, 2147483648
    %v258 = vmul.f32 %v257, 1.442695
    %v259 = vpow.pop %v258
    %v260 = vadd.f32 %v259, 1.0
    %v261 = vrcp.pop %v260
    %v262 = vmul.f32 %v260, %v261
    %v263 = vsub.f32 1.0, %v262
    %v264 = vmul.f32 %v261, %v263
    %v265 = vadd.f32 %v261, %v264
    %vm266 = vweird.f32 %v260
    %vm267 = vweird.f32 %v261
    %vm268 = vmor %vm266, %vm267
    %v269 = vsel %vm268, %v261, %v265
    %v270 = vand.u32 2147483647, %v260
    %vm271 = vcmp.eq.f32.partialorder %v270, 8.507059e+37
    %v272 = vand.u32 %v260, 2147483648
    %v273 = vor.u32 1.1754944e-38, %v272
    %v274 = vsel %vm271, %v273, %v269
    %v275 = vmul.f32 1.0, %v274
    %276 = vrot.lane.b32.xlu0 %v255, 64
    %v277 = vpop.permute.xlu0 %276
    %278 = vrot.lane.b32.xlu0 %v275, 64
    %v279 = vpop.permute.xlu0 %278
    %v280 = vmul.f32 %v277, 0.0
    %v281 = vmul.f32 %v255, %v256
    %v282 = vadd.f32 %v280, %v281
    %v283 = vtanh.pop %v282
    %v284 = vmul.f32 %v279, %v283
    %s285 = scalar_lea.vmem [#allocation2], 16
    %v286 = vld [vmem:[%s285] sm:$0xff]
    %v287 = vld [vmem:[%s285 + $0x8] sm:$0xff]
    %288 = vmatpush.msra.mxu0 %v85
    %289 = vmatpush.msra.mxu0 %v83
    %290 = vmatpush.msra.mxu0 %v81
    %291 = vmatpush.msra.mxu0 %v79
    %292 = vmatpush.msra.mxu0 %v77
    %293 = vmatpush.msra.mxu0 %v75
    %294 = vmatpush.msra.mxu0 %v73
    %295 = vmatpush.msra.mxu0 %v71
    %296 = vmatpush.msra.mxu0 %v69
    %297 = vmatpush.msra.mxu0 %v67
    %298 = vmatpush.msra.mxu0 %v65
    %299 = vmatpush.msra.mxu0 %v63
    %300 = vmatpush.msra.mxu0 %v61
    %301 = vmatpush.msra.mxu0 %v59
    %302 = vmatpush.msra.mxu0 %v57
    %303 = vmatpush.msra.mxu0 %v55
    %304 = vmatmul.f32.gmra.mxu0 %v284
    %v305 = vpop.f32.mrf.mxu0
    %v306 = vadd.f32 %v286, %v305
    %307 = vdwg.mxu0
    %308 = vmatpush.msra.mxu0 %v86
    %309 = vmatpush.msra.mxu0 %v84
    %310 = vmatpush.msra.mxu0 %v82
    %311 = vmatpush.msra.mxu0 %v80
    %312 = vmatpush.msra.mxu0 %v78
    %313 = vmatpush.msra.mxu0 %v76
    %314 = vmatpush.msra.mxu0 %v74
    %315 = vmatpush.msra.mxu0 %v72
    %316 = vmatpush.msra.mxu0 %v70
    %317 = vmatpush.msra.mxu0 %v68
    %318 = vmatpush.msra.mxu0 %v66
    %319 = vmatpush.msra.mxu0 %v64
    %320 = vmatpush.msra.mxu0 %v62
    %321 = vmatpush.msra.mxu0 %v60
    %322 = vmatpush.msra.mxu0 %v58
    %323 = vmatpush.msra.mxu0 %v56
    %324 = vmatmul.f32.gmra.mxu0 %v284
    %v325 = vpop.f32.mrf.mxu0
    %v326 = vadd.f32 %v287, %v325
    %327 = vdwg.mxu0
    %v328 = vxor.u32 %v306, 2147483648
    %v329 = vmul.f32 %v328, 1.442695
    %v330 = vpow.pop %v329
    %v331 = vadd.f32 %v330, 1.0
    %v332 = vrcp.pop %v331
    %v333 = vmul.f32 %v331, %v332
    %v334 = vsub.f32 1.0, %v333
    %v335 = vmul.f32 %v332, %v334
    %v336 = vadd.f32 %v332, %v335
    %vm337 = vweird.f32 %v331
    %vm338 = vweird.f32 %v332
    %vm339 = vmor %vm337, %vm338
    %v340 = vsel %vm339, %v332, %v336
    %v341 = vand.u32 2147483647, %v331
    %vm342 = vcmp.eq.f32.partialorder %v341, 8.507059e+37
    %v343 = vand.u32 %v331, 2147483648
    %v344 = vor.u32 1.1754944e-38, %v343
    %v345 = vsel %vm342, %v344, %v340
    %v346 = vmul.f32 1.0, %v345
    %v347 = vtanh.pop %v326
    %v348 = vxor.u32 %v326, 2147483648
    %v349 = vmul.f32 %v348, 1.442695
    %v350 = vpow.pop %v349
    %v351 = vadd.f32 %v350, 1.0
    %v352 = vrcp.pop %v351
    %v353 = vmul.f32 %v351, %v352
    %v354 = vsub.f32 1.0, %v353
    %v355 = vmul.f32 %v352, %v354
    %v356 = vadd.f32 %v352, %v355
    %vm357 = vweird.f32 %v351
    %vm358 = vweird.f32 %v352
    %vm359 = vmor %vm357, %vm358
    %v360 = vsel %vm359, %v352, %v356
    %v361 = vand.u32 2147483647, %v351
    %vm362 = vcmp.eq.f32.partialorder %v361, 8.507059e+37
    %v363 = vand.u32 %v351, 2147483648
    %v364 = vor.u32 1.1754944e-38, %v363
    %v365 = vsel %vm362, %v364, %v360
    %v366 = vmul.f32 1.0, %v365
    %367 = vrot.lane.b32.xlu0 %v346, 64
    %v368 = vpop.permute.xlu0 %367
    %369 = vrot.lane.b32.xlu0 %v366, 64
    %v370 = vpop.permute.xlu0 %369
    %v371 = vmul.f32 %v368, %v282
    %v372 = vmul.f32 %v346, %v347
    %v373 = vadd.f32 %v371, %v372
    %v374 = vtanh.pop %v373
    %v375 = vmul.f32 %v370, %v374
    %s376 = scalar_lea.vmem [#allocation2], 32
    %v377 = vld [vmem:[%s376] sm:$0xff]
    %v378 = vld [vmem:[%s376 + $0x8] sm:$0xff]
    %379 = vmatpush.msra.mxu0 %v85
    %380 = vmatpush.msra.mxu0 %v83
    %381 = vmatpush.msra.mxu0 %v81
    %382 = vmatpush.msra.mxu0 %v79
    %383 = vmatpush.msra.mxu0 %v77
    %384 = vmatpush.msra.mxu0 %v75
    %385 = vmatpush.msra.mxu0 %v73
    %386 = vmatpush.msra.mxu0 %v71
    %387 = vmatpush.msra.mxu0 %v69
    %388 = vmatpush.msra.mxu0 %v67
    %389 = vmatpush.msra.mxu0 %v65
    %390 = vmatpush.msra.mxu0 %v63
    %391 = vmatpush.msra.mxu0 %v61
    %392 = vmatpush.msra.mxu0 %v59
    %393 = vmatpush.msra.mxu0 %v57
    %394 = vmatpush.msra.mxu0 %v55
    %395 = vmatmul.f32.gmra.mxu0 %v375
    %v396 = vpop.f32.mrf.mxu0
    %v397 = vadd.f32 %v377, %v396
    %398 = vdwg.mxu0
    %399 = vmatpush.msra.mxu0 %v86
    %400 = vmatpush.msra.mxu0 %v84
    %401 = vmatpush.msra.mxu0 %v82
    %402 = vmatpush.msra.mxu0 %v80
    %403 = vmatpush.msra.mxu0 %v78
    %404 = vmatpush.msra.mxu0 %v76
    %405 = vmatpush.msra.mxu0 %v74
    %406 = vmatpush.msra.mxu0 %v72
    %407 = vmatpush.msra.mxu0 %v70
    %408 = vmatpush.msra.mxu0 %v68
    %409 = vmatpush.msra.mxu0 %v66
    %410 = vmatpush.msra.mxu0 %v64
    %411 = vmatpush.msra.mxu0 %v62
    %412 = vmatpush.msra.mxu0 %v60
    %413 = vmatpush.msra.mxu0 %v58
    %414 = vmatpush.msra.mxu0 %v56
    %415 = vmatmul.f32.gmra.mxu0 %v375
    %v416 = vpop.f32.mrf.mxu0
    %v417 = vadd.f32 %v378, %v416
    %418 = vdwg.mxu0
    %v419 = vxor.u32 %v397, 2147483648
    %v420 = vmul.f32 %v419, 1.442695
    %v421 = vpow.pop %v420
    %v422 = vadd.f32 %v421, 1.0
    %v423 = vrcp.pop %v422
    %v424 = vmul.f32 %v422, %v423
    %v425 = vsub.f32 1.0, %v424
    %v426 = vmul.f32 %v423, %v425
    %v427 = vadd.f32 %v423, %v426
    %vm428 = vweird.f32 %v422
    %vm429 = vweird.f32 %v423
    %vm430 = vmor %vm428, %vm429
    %v431 = vsel %vm430, %v423, %v427
    %v432 = vand.u32 2147483647, %v422
    %vm433 = vcmp.eq.f32.partialorder %v432, 8.507059e+37
    %v434 = vand.u32 %v422, 2147483648
    %v435 = vor.u32 1.1754944e-38, %v434
    %v436 = vsel %vm433, %v435, %v431
    %v437 = vmul.f32 1.0, %v436
    %v438 = vtanh.pop %v417
    %v439 = vxor.u32 %v417, 2147483648
    %v440 = vmul.f32 %v439, 1.442695
    %v441 = vpow.pop %v440
    %v442 = vadd.f32 %v441, 1.0
    %v443 = vrcp.pop %v442
    %v444 = vmul.f32 %v442, %v443
    %v445 = vsub.f32 1.0, %v444
    %v446 = vmul.f32 %v443, %v445
    %v447 = vadd.f32 %v443, %v446
    %vm448 = vweird.f32 %v442
    %vm449 = vweird.f32 %v443
    %vm450 = vmor %vm448, %vm449
    %v451 = vsel %vm450, %v443, %v447
    %v452 = vand.u32 2147483647, %v442
    %vm453 = vcmp.eq.f32.partialorder %v452, 8.507059e+37
    %v454 = vand.u32 %v442, 2147483648
    %v455 = vor.u32 1.1754944e-38, %v454
    %v456 = vsel %vm453, %v455, %v451
    %v457 = vmul.f32 1.0, %v456
    %458 = vrot.lane.b32.xlu0 %v437, 64
    %v459 = vpop.permute.xlu0 %458
    %460 = vrot.lane.b32.xlu0 %v457, 64
    %v461 = vpop.permute.xlu0 %460
    %v462 = vmul.f32 %v459, %v373
    %v463 = vmul.f32 %v437, %v438
    %v464 = vadd.f32 %v462, %v463
    %v465 = vtanh.pop %v464
    %v466 = vmul.f32 %v461, %v465
    %s467 = scalar_lea.vmem [#allocation2], 48
    %v468 = vld [vmem:[%s467] sm:$0xff]
    %v469 = vld [vmem:[%s467 + $0x8] sm:$0xff]
    %470 = vmatpush.msra.mxu0 %v85
    %471 = vmatpush.msra.mxu0 %v83
    %472 = vmatpush.msra.mxu0 %v81
    %473 = vmatpush.msra.mxu0 %v79
    %474 = vmatpush.msra.mxu0 %v77
    %475 = vmatpush.msra.mxu0 %v75
    %476 = vmatpush.msra.mxu0 %v73
    %477 = vmatpush.msra.mxu0 %v71
    %478 = vmatpush.msra.mxu0 %v69
    %479 = vmatpush.msra.mxu0 %v67
    %480 = vmatpush.msra.mxu0 %v65
    %481 = vmatpush.msra.mxu0 %v63
    %482 = vmatpush.msra.mxu0 %v61
    %483 = vmatpush.msra.mxu0 %v59
    %484 = vmatpush.msra.mxu0 %v57
    %485 = vmatpush.msra.mxu0 %v55
    %486 = vmatmul.f32.gmra.mxu0 %v466
    %v487 = vpop.f32.mrf.mxu0
    %v488 = vadd.f32 %v468, %v487
    %489 = vdwg.mxu0
    %490 = vmatpush.msra.mxu0 %v86
    %491 = vmatpush.msra.mxu0 %v84
    %492 = vmatpush.msra.mxu0 %v82
    %493 = vmatpush.msra.mxu0 %v80
    %494 = vmatpush.msra.mxu0 %v78
    %495 = vmatpush.msra.mxu0 %v76
    %496 = vmatpush.msra.mxu0 %v74
    %497 = vmatpush.msra.mxu0 %v72
    %498 = vmatpush.msra.mxu0 %v70
    %499 = vmatpush.msra.mxu0 %v68
    %500 = vmatpush.msra.mxu0 %v66
    %501 = vmatpush.msra.mxu0 %v64
    %502 = vmatpush.msra.mxu0 %v62
    %503 = vmatpush.msra.mxu0 %v60
    %504 = vmatpush.msra.mxu0 %v58
    %505 = vmatpush.msra.mxu0 %v56
    %506 = vmatmul.f32.gmra.mxu0 %v466
    %v507 = vpop.f32.mrf.mxu0
    %v508 = vadd.f32 %v469, %v507
    %509 = vdwg.mxu0
    %v510 = vxor.u32 %v488, 2147483648
    %v511 = vmul.f32 %v510, 1.442695
    %v512 = vpow.pop %v511
    %v513 = vadd.f32 %v512, 1.0
    %v514 = vrcp.pop %v513
    %v515 = vmul.f32 %v513, %v514
    %v516 = vsub.f32 1.0, %v515
    %v517 = vmul.f32 %v514, %v516
    %v518 = vadd.f32 %v514, %v517
    %vm519 = vweird.f32 %v513
    %vm520 = vweird.f32 %v514
    %vm521 = vmor %vm519, %vm520
    %v522 = vsel %vm521, %v514, %v518
    %v523 = vand.u32 2147483647, %v513
    %vm524 = vcmp.eq.f32.partialorder %v523, 8.507059e+37
    %v525 = vand.u32 %v513, 2147483648
    %v526 = vor.u32 1.1754944e-38, %v525
    %v527 = vsel %vm524, %v526, %v522
    %v528 = vmul.f32 1.0, %v527
    %v529 = vtanh.pop %v508
    %v530 = vxor.u32 %v508, 2147483648
    %v531 = vmul.f32 %v530, 1.442695
    %v532 = vpow.pop %v531
    %v533 = vadd.f32 %v532, 1.0
    %v534 = vrcp.pop %v533
    %v535 = vmul.f32 %v533, %v534
    %v536 = vsub.f32 1.0, %v535
    %v537 = vmul.f32 %v534, %v536
    %v538 = vadd.f32 %v534, %v537
    %vm539 = vweird.f32 %v533
    %vm540 = vweird.f32 %v534
    %vm541 = vmor %vm539, %vm540
    %v542 = vsel %vm541, %v534, %v538
    %v543 = vand.u32 2147483647, %v533
    %vm544 = vcmp.eq.f32.partialorder %v543, 8.507059e+37
    %v545 = vand.u32 %v533, 2147483648
    %v546 = vor.u32 1.1754944e-38, %v545
    %v547 = vsel %vm544, %v546, %v542
    %v548 = vmul.f32 1.0, %v547
    %549 = vrot.lane.b32.xlu0 %v528, 64
    %v550 = vpop.permute.xlu0 %549
    %551 = vrot.lane.b32.xlu0 %v548, 64
    %v552 = vpop.permute.xlu0 %551
    %v553 = vmul.f32 %v550, %v464
    %v554 = vmul.f32 %v528, %v529
    %v555 = vadd.f32 %v553, %v554
    %v556 = vtanh.pop %v555
    %v557 = vmul.f32 %v552, %v556
    %s558 = scalar_lea.vmem [#allocation2], 64
    %v559 = vld [vmem:[%s558] sm:$0xff]
    %v560 = vld [vmem:[%s558 + $0x8] sm:$0xff]
    %561 = vmatpush.msra.mxu0 %v85
    %562 = vmatpush.msra.mxu0 %v83
    %563 = vmatpush.msra.mxu0 %v81
    %564 = vmatpush.msra.mxu0 %v79
    %565 = vmatpush.msra.mxu0 %v77
    %566 = vmatpush.msra.mxu0 %v75
    %567 = vmatpush.msra.mxu0 %v73
    %568 = vmatpush.msra.mxu0 %v71
    %569 = vmatpush.msra.mxu0 %v69
    %570 = vmatpush.msra.mxu0 %v67
    %571 = vmatpush.msra.mxu0 %v65
    %572 = vmatpush.msra.mxu0 %v63
    %573 = vmatpush.msra.mxu0 %v61
    %574 = vmatpush.msra.mxu0 %v59
    %575 = vmatpush.msra.mxu0 %v57
    %576 = vmatpush.msra.mxu0 %v55
    %577 = vmatmul.f32.gmra.mxu0 %v557
    %v578 = vpop.f32.mrf.mxu0
    %v579 = vadd.f32 %v559, %v578
    %580 = vdwg.mxu0
    %581 = vmatpush.msra.mxu0 %v86
    %582 = vmatpush.msra.mxu0 %v84
    %583 = vmatpush.msra.mxu0 %v82
    %584 = vmatpush.msra.mxu0 %v80
    %585 = vmatpush.msra.mxu0 %v78
    %586 = vmatpush.msra.mxu0 %v76
    %587 = vmatpush.msra.mxu0 %v74
    %588 = vmatpush.msra.mxu0 %v72
    %589 = vmatpush.msra.mxu0 %v70
    %590 = vmatpush.msra.mxu0 %v68
    %591 = vmatpush.msra.mxu0 %v66
    %592 = vmatpush.msra.mxu0 %v64
    %593 = vmatpush.msra.mxu0 %v62
    %594 = vmatpush.msra.mxu0 %v60
    %595 = vmatpush.msra.mxu0 %v58
    %596 = vmatpush.msra.mxu0 %v56
    %597 = vmatmul.f32.gmra.mxu0 %v557
    %v598 = vpop.f32.mrf.mxu0
    %v599 = vadd.f32 %v560, %v598
    %600 = vdwg.mxu0
    %v601 = vxor.u32 %v579, 2147483648
    %v602 = vmul.f32 %v601, 1.442695
    %v603 = vpow.pop %v602
    %v604 = vadd.f32 %v603, 1.0
    %v605 = vrcp.pop %v604
    %v606 = vmul.f32 %v604, %v605
    %v607 = vsub.f32 1.0, %v606
    %v608 = vmul.f32 %v605, %v607
    %v609 = vadd.f32 %v605, %v608
    %vm610 = vweird.f32 %v604
    %vm611 = vweird.f32 %v605
    %vm612 = vmor %vm610, %vm611
    %v613 = vsel %vm612, %v605, %v609
    %v614 = vand.u32 2147483647, %v604
    %vm615 = vcmp.eq.f32.partialorder %v614, 8.507059e+37
    %v616 = vand.u32 %v604, 2147483648
    %v617 = vor.u32 1.1754944e-38, %v616
    %v618 = vsel %vm615, %v617, %v613
    %v619 = vmul.f32 1.0, %v618
    %v620 = vtanh.pop %v599
    %v621 = vxor.u32 %v599, 2147483648
    %v622 = vmul.f32 %v621, 1.442695
    %v623 = vpow.pop %v622
    %v624 = vadd.f32 %v623, 1.0
    %v625 = vrcp.pop %v624
    %v626 = vmul.f32 %v624, %v625
    %v627 = vsub.f32 1.0, %v626
    %v628 = vmul.f32 %v625, %v627
    %v629 = vadd.f32 %v625, %v628
    %vm630 = vweird.f32 %v624
    %vm631 = vweird.f32 %v625
    %vm632 = vmor %vm630, %vm631
    %v633 = vsel %vm632, %v625, %v629
    %v634 = vand.u32 2147483647, %v624
    %vm635 = vcmp.eq.f32.partialorder %v634, 8.507059e+37
    %v636 = vand.u32 %v624, 2147483648
    %v637 = vor.u32 1.1754944e-38, %v636
    %v638 = vsel %vm635, %v637, %v633
    %v639 = vmul.f32 1.0, %v638
    %640 = vrot.lane.b32.xlu0 %v619, 64
    %v641 = vpop.permute.xlu0 %640
    %642 = vrot.lane.b32.xlu0 %v639, 64
    %v643 = vpop.permute.xlu0 %642
    %v644 = vmul.f32 %v641, %v555
    %v645 = vmul.f32 %v619, %v620
    %v646 = vadd.f32 %v644, %v645
    %v647 = vtanh.pop %v646
    %v648 = vmul.f32 %v643, %v647
    %s649 = scalar_lea.vmem [#allocation2], 80
    %v650 = vld [vmem:[%s649] sm:$0xff]
    %v651 = vld [vmem:[%s649 + $0x8] sm:$0xff]
    %652 = vmatpush.msra.mxu0 %v85
    %653 = vmatpush.msra.mxu0 %v83
    %654 = vmatpush.msra.mxu0 %v81
    %655 = vmatpush.msra.mxu0 %v79
    %656 = vmatpush.msra.mxu0 %v77
    %657 = vmatpush.msra.mxu0 %v75
    %658 = vmatpush.msra.mxu0 %v73
    %659 = vmatpush.msra.mxu0 %v71
    %660 = vmatpush.msra.mxu0 %v69
    %661 = vmatpush.msra.mxu0 %v67
    %662 = vmatpush.msra.mxu0 %v65
    %663 = vmatpush.msra.mxu0 %v63
    %664 = vmatpush.msra.mxu0 %v61
    %665 = vmatpush.msra.mxu0 %v59
    %666 = vmatpush.msra.mxu0 %v57
    %667 = vmatpush.msra.mxu0 %v55
    %668 = vmatmul.f32.gmra.mxu0 %v648
    %v669 = vpop.f32.mrf.mxu0
    %v670 = vadd.f32 %v650, %v669
    %671 = vdwg.mxu0
    %672 = vmatpush.msra.mxu0 %v86
    %673 = vmatpush.msra.mxu0 %v84
    %674 = vmatpush.msra.mxu0 %v82
    %675 = vmatpush.msra.mxu0 %v80
    %676 = vmatpush.msra.mxu0 %v78
    %677 = vmatpush.msra.mxu0 %v76
    %678 = vmatpush.msra.mxu0 %v74
    %679 = vmatpush.msra.mxu0 %v72
    %680 = vmatpush.msra.mxu0 %v70
    %681 = vmatpush.msra.mxu0 %v68
    %682 = vmatpush.msra.mxu0 %v66
    %683 = vmatpush.msra.mxu0 %v64
    %684 = vmatpush.msra.mxu0 %v62
    %685 = vmatpush.msra.mxu0 %v60
    %686 = vmatpush.msra.mxu0 %v58
    %687 = vmatpush.msra.mxu0 %v56
    %688 = vmatmul.f32.gmra.mxu0 %v648
    %v689 = vpop.f32.mrf.mxu0
    %v690 = vadd.f32 %v651, %v689
    %691 = vdwg.mxu0
    %v692 = vxor.u32 %v670, 2147483648
    %v693 = vmul.f32 %v692, 1.442695
    %v694 = vpow.pop %v693
    %v695 = vadd.f32 %v694, 1.0
    %v696 = vrcp.pop %v695
    %v697 = vmul.f32 %v695, %v696
    %v698 = vsub.f32 1.0, %v697
    %v699 = vmul.f32 %v696, %v698
    %v700 = vadd.f32 %v696, %v699
    %vm701 = vweird.f32 %v695
    %vm702 = vweird.f32 %v696
    %vm703 = vmor %vm701, %vm702
    %v704 = vsel %vm703, %v696, %v700
    %v705 = vand.u32 2147483647, %v695
    %vm706 = vcmp.eq.f32.partialorder %v705, 8.507059e+37
    %v707 = vand.u32 %v695, 2147483648
    %v708 = vor.u32 1.1754944e-38, %v707
    %v709 = vsel %vm706, %v708, %v704
    %v710 = vmul.f32 1.0, %v709
    %v711 = vtanh.pop %v690
    %v712 = vxor.u32 %v690, 2147483648
    %v713 = vmul.f32 %v712, 1.442695
    %v714 = vpow.pop %v713
    %v715 = vadd.f32 %v714, 1.0
    %v716 = vrcp.pop %v715
    %v717 = vmul.f32 %v715, %v716
    %v718 = vsub.f32 1.0, %v717
    %v719 = vmul.f32 %v716, %v718
    %v720 = vadd.f32 %v716, %v719
    %vm721 = vweird.f32 %v715
    %vm722 = vweird.f32 %v716
    %vm723 = vmor %vm721, %vm722
    %v724 = vsel %vm723, %v716, %v720
    %v725 = vand.u32 2147483647, %v715
    %vm726 = vcmp.eq.f32.partialorder %v725, 8.507059e+37
    %v727 = vand.u32 %v715, 2147483648
    %v728 = vor.u32 1.1754944e-38, %v727
    %v729 = vsel %vm726, %v728, %v724
    %v730 = vmul.f32 1.0, %v729
    %731 = vrot.lane.b32.xlu0 %v710, 64
    %v732 = vpop.permute.xlu0 %731
    %733 = vrot.lane.b32.xlu0 %v730, 64
    %v734 = vpop.permute.xlu0 %733
    %v735 = vmul.f32 %v732, %v646
    %v736 = vmul.f32 %v710, %v711
    %v737 = vadd.f32 %v735, %v736
    %v738 = vtanh.pop %v737
    %v739 = vmul.f32 %v734, %v738
    %s740 = scalar_lea.vmem [#allocation2], 96
    %v741 = vld [vmem:[%s740] sm:$0xff]
    %v742 = vld [vmem:[%s740 + $0x8] sm:$0xff]
    %743 = vmatpush.msra.mxu0 %v85
    %744 = vmatpush.msra.mxu0 %v83
    %745 = vmatpush.msra.mxu0 %v81
    %746 = vmatpush.msra.mxu0 %v79
    %747 = vmatpush.msra.mxu0 %v77
    %748 = vmatpush.msra.mxu0 %v75
    %749 = vmatpush.msra.mxu0 %v73
    %750 = vmatpush.msra.mxu0 %v71
    %751 = vmatpush.msra.mxu0 %v69
    %752 = vmatpush.msra.mxu0 %v67
    %753 = vmatpush.msra.mxu0 %v65
    %754 = vmatpush.msra.mxu0 %v63
    %755 = vmatpush.msra.mxu0 %v61
    %756 = vmatpush.msra.mxu0 %v59
    %757 = vmatpush.msra.mxu0 %v57
    %758 = vmatpush.msra.mxu0 %v55
    %759 = vmatmul.f32.gmra.mxu0 %v739
    %v760 = vpop.f32.mrf.mxu0
    %v761 = vadd.f32 %v741, %v760
    %762 = vdwg.mxu0
    %763 = vmatpush.msra.mxu0 %v86
    %764 = vmatpush.msra.mxu0 %v84
    %765 = vmatpush.msra.mxu0 %v82
    %766 = vmatpush.msra.mxu0 %v80
    %767 = vmatpush.msra.mxu0 %v78
    %768 = vmatpush.msra.mxu0 %v76
    %769 = vmatpush.msra.mxu0 %v74
    %770 = vmatpush.msra.mxu0 %v72
    %771 = vmatpush.msra.mxu0 %v70
    %772 = vmatpush.msra.mxu0 %v68
    %773 = vmatpush.msra.mxu0 %v66
    %774 = vmatpush.msra.mxu0 %v64
    %775 = vmatpush.msra.mxu0 %v62
    %776 = vmatpush.msra.mxu0 %v60
    %777 = vmatpush.msra.mxu0 %v58
    %778 = vmatpush.msra.mxu0 %v56
    %779 = vmatmul.f32.gmra.mxu0 %v739
    %v780 = vpop.f32.mrf.mxu0
    %v781 = vadd.f32 %v742, %v780
    %782 = vdwg.mxu0
    %v783 = vxor.u32 %v761, 2147483648
    %v784 = vmul.f32 %v783, 1.442695
    %v785 = vpow.pop %v784
    %v786 = vadd.f32 %v785, 1.0
    %v787 = vrcp.pop %v786
    %v788 = vmul.f32 %v786, %v787
    %v789 = vsub.f32 1.0, %v788
    %v790 = vmul.f32 %v787, %v789
    %v791 = vadd.f32 %v787, %v790
    %vm792 = vweird.f32 %v786
    %vm793 = vweird.f32 %v787
    %vm794 = vmor %vm792, %vm793
    %v795 = vsel %vm794, %v787, %v791
    %v796 = vand.u32 2147483647, %v786
    %vm797 = vcmp.eq.f32.partialorder %v796, 8.507059e+37
    %v798 = vand.u32 %v786, 2147483648
    %v799 = vor.u32 1.1754944e-38, %v798
    %v800 = vsel %vm797, %v799, %v795
    %v801 = vmul.f32 1.0, %v800
    %v802 = vtanh.pop %v781
    %v803 = vxor.u32 %v781, 2147483648
    %v804 = vmul.f32 %v803, 1.442695
    %v805 = vpow.pop %v804
    %v806 = vadd.f32 %v805, 1.0
    %v807 = vrcp.pop %v806
    %v808 = vmul.f32 %v806, %v807
    %v809 = vsub.f32 1.0, %v808
    %v810 = vmul.f32 %v807, %v809
    %v811 = vadd.f32 %v807, %v810
    %vm812 = vweird.f32 %v806
    %vm813 = vweird.f32 %v807
    %vm814 = vmor %vm812, %vm813
    %v815 = vsel %vm814, %v807, %v811
    %v816 = vand.u32 2147483647, %v806
    %vm817 = vcmp.eq.f32.partialorder %v816, 8.507059e+37
    %v818 = vand.u32 %v806, 2147483648
    %v819 = vor.u32 1.1754944e-38, %v818
    %v820 = vsel %vm817, %v819, %v815
    %v821 = vmul.f32 1.0, %v820
    %822 = vrot.lane.b32.xlu0 %v801, 64
    %v823 = vpop.permute.xlu0 %822
    %824 = vrot.lane.b32.xlu0 %v821, 64
    %v825 = vpop.permute.xlu0 %824
    %v826 = vmul.f32 %v823, %v737
    %v827 = vmul.f32 %v801, %v802
    %v828 = vadd.f32 %v826, %v827
    %v829 = vtanh.pop %v828
    %v830 = vmul.f32 %v825, %v829
    %s831 = scalar_lea.vmem [#allocation2], 112
    %v832 = vld [vmem:[%s831] sm:$0xff]
    %v833 = vld [vmem:[%s831 + $0x8] sm:$0xff]
    %834 = vmatpush.msra.mxu0 %v85
    %835 = vmatpush.msra.mxu0 %v83
    %836 = vmatpush.msra.mxu0 %v81
    %837 = vmatpush.msra.mxu0 %v79
    %838 = vmatpush.msra.mxu0 %v77
    %839 = vmatpush.msra.mxu0 %v75
    %840 = vmatpush.msra.mxu0 %v73
    %841 = vmatpush.msra.mxu0 %v71
    %842 = vmatpush.msra.mxu0 %v69
    %843 = vmatpush.msra.mxu0 %v67
    %844 = vmatpush.msra.mxu0 %v65
    %845 = vmatpush.msra.mxu0 %v63
    %846 = vmatpush.msra.mxu0 %v61
    %847 = vmatpush.msra.mxu0 %v59
    %848 = vmatpush.msra.mxu0 %v57
    %849 = vmatpush.msra.mxu0 %v55
    %850 = vmatmul.f32.gmra.mxu0 %v830
    %v851 = vpop.f32.mrf.mxu0
    %v852 = vadd.f32 %v832, %v851
    %853 = vdwg.mxu0
    %854 = vmatpush.msra.mxu0 %v86
    %855 = vmatpush.msra.mxu0 %v84
    %856 = vmatpush.msra.mxu0 %v82
    %857 = vmatpush.msra.mxu0 %v80
    %858 = vmatpush.msra.mxu0 %v78
    %859 = vmatpush.msra.mxu0 %v76
    %860 = vmatpush.msra.mxu0 %v74
    %861 = vmatpush.msra.mxu0 %v72
    %862 = vmatpush.msra.mxu0 %v70
    %863 = vmatpush.msra.mxu0 %v68
    %864 = vmatpush.msra.mxu0 %v66
    %865 = vmatpush.msra.mxu0 %v64
    %866 = vmatpush.msra.mxu0 %v62
    %867 = vmatpush.msra.mxu0 %v60
    %868 = vmatpush.msra.mxu0 %v58
    %869 = vmatpush.msra.mxu0 %v56
    %870 = vmatmul.f32.gmra.mxu0 %v830
    %v871 = vpop.f32.mrf.mxu0
    %v872 = vadd.f32 %v833, %v871
    %873 = vdwg.mxu0
    %v874 = vxor.u32 %v852, 2147483648
    %v875 = vmul.f32 %v874, 1.442695
    %v876 = vpow.pop %v875
    %v877 = vadd.f32 %v876, 1.0
    %v878 = vrcp.pop %v877
    %v879 = vmul.f32 %v877, %v878
    %v880 = vsub.f32 1.0, %v879
    %v881 = vmul.f32 %v878, %v880
    %v882 = vadd.f32 %v878, %v881
    %vm883 = vweird.f32 %v877
    %vm884 = vweird.f32 %v878
    %vm885 = vmor %vm883, %vm884
    %v886 = vsel %vm885, %v878, %v882
    %v887 = vand.u32 2147483647, %v877
    %vm888 = vcmp.eq.f32.partialorder %v887, 8.507059e+37
    %v889 = vand.u32 %v877, 2147483648
    %v890 = vor.u32 1.1754944e-38, %v889
    %v891 = vsel %vm888, %v890, %v886
    %v892 = vmul.f32 1.0, %v891
    %v893 = vtanh.pop %v872
    %v894 = vxor.u32 %v872, 2147483648
    %v895 = vmul.f32 %v894, 1.442695
    %v896 = vpow.pop %v895
    %v897 = vadd.f32 %v896, 1.0
    %v898 = vrcp.pop %v897
    %v899 = vmul.f32 %v897, %v898
    %v900 = vsub.f32 1.0, %v899
    %v901 = vmul.f32 %v898, %v900
    %v902 = vadd.f32 %v898, %v901
    %vm903 = vweird.f32 %v897
    %vm904 = vweird.f32 %v898
    %vm905 = vmor %vm903, %vm904
    %v906 = vsel %vm905, %v898, %v902
    %v907 = vand.u32 2147483647, %v897
    %vm908 = vcmp.eq.f32.partialorder %v907, 8.507059e+37
    %v909 = vand.u32 %v897, 2147483648
    %v910 = vor.u32 1.1754944e-38, %v909
    %v911 = vsel %vm908, %v910, %v906
    %v912 = vmul.f32 1.0, %v911
    %913 = vrot.lane.b32.xlu0 %v892, 64
    %v914 = vpop.permute.xlu0 %913
    %915 = vrot.lane.b32.xlu0 %v912, 64
    %v916 = vpop.permute.xlu0 %915
    %v917 = vmul.f32 %v914, %v828
    %v918 = vmul.f32 %v892, %v893
    %v919 = vadd.f32 %v917, %v918
    %v920 = vtanh.pop %v919
    %v921 = vmul.f32 %v916, %v920
    %v922 = vld [vmem:[#allocation5] sm:$0xff]
    %v923 = vld [vmem:[#allocation5 + $0x8] sm:$0xff]
    %v924 = vld [vmem:[#allocation5 + $0x10] sm:$0xff]
    %v925 = vld [vmem:[#allocation5 + $0x18] sm:$0xff]
    %v926 = vld [vmem:[#allocation5 + $0x20] sm:$0xff]
    %v927 = vld [vmem:[#allocation5 + $0x28] sm:$0xff]
    %v928 = vld [vmem:[#allocation5 + $0x30] sm:$0xff]
    %v929 = vld [vmem:[#allocation5 + $0x38] sm:$0xff]
    %v930 = vld [vmem:[#allocation5 + $0x40] sm:$0xff]
    %v931 = vld [vmem:[#allocation5 + $0x48] sm:$0xff]
    %v932 = vld [vmem:[#allocation5 + $0x50] sm:$0xff]
    %v933 = vld [vmem:[#allocation5 + $0x58] sm:$0xff]
    %v934 = vld [vmem:[#allocation5 + $0x60] sm:$0xff]
    %v935 = vld [vmem:[#allocation5 + $0x68] sm:$0xff]
    %v936 = vld [vmem:[#allocation5 + $0x70] sm:$0xff]
    %v937 = vld [vmem:[#allocation5 + $0x78] sm:$0xff]
    %v938 = vld [vmem:[%s5] sm:$0x1]
    %v940 = vperm.slane %v938, 0
    %942 = vmatpush.msra.mxu0 %v937
    %943 = vmatpush.msra.mxu0 %v936
    %944 = vmatpush.msra.mxu0 %v935
    %945 = vmatpush.msra.mxu0 %v934
    %946 = vmatpush.msra.mxu0 %v933
    %947 = vmatpush.msra.mxu0 %v932
    %948 = vmatpush.msra.mxu0 %v931
    %949 = vmatpush.msra.mxu0 %v930
    %950 = vmatpush.msra.mxu0 %v929
    %951 = vmatpush.msra.mxu0 %v928
    %952 = vmatpush.msra.mxu0 %v927
    %953 = vmatpush.msra.mxu0 %v926
    %954 = vmatpush.msra.mxu0 %v925
    %955 = vmatpush.msra.mxu0 %v924
    %956 = vmatpush.msra.mxu0 %v923
    %957 = vmatpush.msra.mxu0 %v922
    %958 = vmatmul.f32.gmra.mxu0 %v921
    %v959 = vpop.f32.mrf.mxu0
    %v960 = vadd.f32 %v940, %v959
    %961 = vdwg.mxu0
    %962 = vst [vmem:[%s6] sm:$0xff] %v960
    // Predicated region
    $region34: #{lstm_model_forward.1} parent=1 // pred_check
      _
    $region35: #{lstm_model_forward.1} parent=1 // pred_check_branch
      %964 = sbr.rel (0) target = $region37
    $region36: #{lstm_model_forward.1} parent=1 // pred_region
      _
    $region37: #{lstm_model_forward.1} parent=1 // pred_fallthru
      _
    // Predicated region
    $region38: #{lstm_model_forward.1} parent=1 // pred_check
      _
    $region39: #{lstm_model_forward.1} parent=1 // pred_check_branch
      %966 = sbr.rel (0) target = $region41
    $region40: #{lstm_model_forward.1} parent=1 // pred_region
      _
    $region41: #{lstm_model_forward.1} parent=1 // pred_fallthru
      _
    %967 = vsyncpa [#allocation4], 1
    %968 = vsyncpa [#allocation6], 1

</llo_original>
